<compile_context>
chip_gen: v6e
topology: v6e:2x2x1
jax: 0.10.0
libtpu: 0.0.40
codegen_flags: <defaults>
</compile_context>

<pallas_src>
import jax
import jax.numpy as jnp
from jax.experimental import pallas as pl
from jax.experimental.pallas import tpu as pltpu

D_DESC = 32      # descriptor dimension of the stand-in feature extractor
KP_STRIDE = 2    # keypoints sampled on a fixed grid every KP_STRIDE pixels
VMEM_LIMIT = 32 * 1024 * 1024   # explicit scoped-VMEM budget; safe on v5e/v6e/v7x


# ---------------------------------------------------------------------------
# Tile-size helpers
# ---------------------------------------------------------------------------
def _row_tile(n, target=512):
    """Largest multiple-of-8 divisor of n that is <= target and < n (so the grid
    has >1 step and the input/output DMAs get double-buffered); fallback n."""
    t = min(target, n)
    t -= t % 8
    while t >= 8:
        if n % t == 0 and t < n:
            return t
        t -= 8
    return n


# ---------------------------------------------------------------------------
# Pallas kernel 1: fused 3x3-conv (patches @ W) + bias + ReLU + L2-norm + score
# ---------------------------------------------------------------------------
def _desc_kernel(patch_ref, w_ref, b_ref, desc_ref, score_ref):
    # patch_ref: [TILE_N, 9]  f32 patches at the stride-2 keypoint grid
    # w_ref:     [9, D]       f32 (resident across the grid)
    # b_ref:     [1, D]       f32 (resident across the grid)
    # desc_ref:  [TILE_N, D]  L2-normalized descriptors
    # score_ref: [TILE_N, 1]  synthetic keypoint scores
    feat = jnp.dot(patch_ref[...], w_ref[...], preferred_element_type=jnp.float32)
    feat = jnp.maximum(feat + b_ref[...], 0.0)                   # bias + ReLU
    sq = jnp.sum(feat * feat, axis=-1, keepdims=True) + 1e-8     # [TILE_N, 1]
    inv = jax.lax.rsqrt(sq)                                      # EUP rsqrt (free slot)
    desc_ref[...] = feat * inv                                   # fused L2 normalize
    nrm = sq * inv                                               # = sqrt(sq)
    score_ref[...] = nrm / (1.0 + nrm)                           # synthetic scores


def conv_descriptors(patches, w_mat, b_mat):
    n, k = patches.shape
    d = w_mat.shape[1]
    tile_n = _row_tile(n)
    desc, score = pl.pallas_call(
        _desc_kernel,
        out_shape=(jax.ShapeDtypeStruct((n, d), jnp.float32),
                   jax.ShapeDtypeStruct((n, 1), jnp.float32)),
        grid=(n // tile_n,),
        in_specs=[
            pl.BlockSpec((tile_n, k), lambda i: (i, 0)),   # streamed row tiles
            pl.BlockSpec((k, d), lambda i: (0, 0)),        # resident weights
            pl.BlockSpec((1, d), lambda i: (0, 0)),        # resident bias
        ],
        out_specs=(
            pl.BlockSpec((tile_n, d), lambda i: (i, 0)),
            pl.BlockSpec((tile_n, 1), lambda i: (i, 0)),
        ),
        compiler_params=pltpu.CompilerParams(
            dimension_semantics=("parallel",),
            vmem_limit_bytes=VMEM_LIMIT),
    )(patches, w_mat, b_mat)
    return desc, score


# ---------------------------------------------------------------------------
# Pallas kernel 2: mutual nearest-neighbor, both directions from ONE sim matrix.
# Grid tiles over image-0 query rows; image-1 descriptors stay resident.
#   A->B: lane-axis reduce  -> per-tile [TILE, 1] best value / first index.
#   B->A: sublane-axis reduce -> lane-dense [1, NB] running max accumulated
#         across tiles (strict > keeps the earliest tile on ties => first argmax).
# ---------------------------------------------------------------------------
def _mutual_nn_kernel(a_ref, b_ref, idx0_ref, val0_ref, idx1_ref, val1_ref):
    i = pl.program_id(0)
    tm = a_ref.shape[0]
    nb = b_ref.shape[0]

    # NT dot_general (contract last dims, no in-kernel .T relayout); bf16 in,
    # f32 MXU accumulate.  sim: [TILE, NB]
    sim = jax.lax.dot_general(
        a_ref[...], b_ref[...],
        dimension_numbers=(((1,), (1,)), ((), ())),
        preferred_element_type=jnp.float32)

    # ---- A -> B : per-tile reduce along lanes (XLU) ----
    best0 = jnp.max(sim, axis=1, keepdims=True)                      # [TILE, 1]
    col_ids = jax.lax.broadcasted_iota(jnp.int32, sim.shape, 1)
    idx0 = jnp.min(jnp.where(sim >= best0, col_ids, nb),
                   axis=1, keepdims=True)                            # first max index
    val0_ref[...] = best0
    idx0_ref[...] = idx0

    # ---- B -> A : sublane reduce -> lane-dense [1, NB], accumulated over tiles ----
    local_best = jnp.max(sim, axis=0, keepdims=True)                 # [1, NB]
    row_ids = jax.lax.broadcasted_iota(jnp.int32, sim.shape, 0)
    local_idx = jnp.min(jnp.where(sim >= local_best, row_ids, tm),
                        axis=0, keepdims=True) + i * tm              # global A index

    @pl.when(i == 0)
    def _():
        val1_ref[...] = local_best
        idx1_ref[...] = local_idx

    @pl.when(i > 0)
    def _():
        prev_val = val1_ref[...]
        take_new = local_best > prev_val        # strict > : earliest tile wins ties
        val1_ref[...] = jnp.where(take_new, local_best, prev_val)
        idx1_ref[...] = jnp.where(take_new, local_idx, idx1_ref[...])


def _mutual_nn(desc_a, desc_b):
    # TODO(synk): for very large NB the resident B set / sim tile would also need
    # tiling over NB (second grid axis); small keypoint counts here fit VMEM.
    na, d = desc_a.shape
    nb, _ = desc_b.shape
    tile_m = _row_tile(na)
    idx0, val0, idx1, val1 = pl.pallas_call(
        _mutual_nn_kernel,
        out_shape=(jax.ShapeDtypeStruct((na, 1), jnp.int32),
                   jax.ShapeDtypeStruct((na, 1), jnp.float32),
                   jax.ShapeDtypeStruct((1, nb), jnp.int32),
                   jax.ShapeDtypeStruct((1, nb), jnp.float32)),
        grid=(na // tile_m,),
        in_specs=[
            pl.BlockSpec((tile_m, d), lambda i: (i, 0)),   # streamed query tiles
            pl.BlockSpec((nb, d), lambda i: (0, 0)),       # resident reference set
        ],
        out_specs=(
            pl.BlockSpec((tile_m, 1), lambda i: (i, 0)),   # A->B per-tile outputs
            pl.BlockSpec((tile_m, 1), lambda i: (i, 0)),
            pl.BlockSpec((1, nb), lambda i: (0, 0)),       # B->A resident accumulators
            pl.BlockSpec((1, nb), lambda i: (0, 0)),
        ),
        compiler_params=pltpu.CompilerParams(
            dimension_semantics=("arbitrary",),            # B->A outputs accumulate
            vmem_limit_bytes=VMEM_LIMIT),
    )(desc_a, desc_b)
    return idx0[:, 0], val0[:, 0], idx1[0], val1[0]


def nn_match(desc0, desc1):
    n0 = desc0.shape[0]
    n1 = desc1.shape[0]
    # bf16 descriptors halve HBM/VMEM traffic and double MXU rate; accumulate f32.
    d0 = desc0.astype(jnp.bfloat16)
    d1 = desc1.astype(jnp.bfloat16)
    idx0, val0, idx1, val1 = _mutual_nn(d0, d1)   # single fused pass
    # Mutual nearest-neighbor check on tiny [N] vectors (outside the kernel).
    mutual0 = jnp.take(idx1, idx0) == jnp.arange(n0, dtype=jnp.int32)
    mutual1 = jnp.take(idx0, idx1) == jnp.arange(n1, dtype=jnp.int32)
    matches0 = jnp.where(mutual0, idx0, -1)
    matches1 = jnp.where(mutual1, idx1, -1)
    scores0 = jnp.where(mutual0, val0, 0.0)
    scores1 = jnp.where(mutual1, val1, 0.0)
    return {
        "matches0": matches0[None],
        "matching_scores0": scores0[None],
        "matches1": matches1[None],
        "matching_scores1": scores1[None],
    }


# ---------------------------------------------------------------------------
# Glue: keypoint-grid patch extraction, DarkFeat stand-in, NNMatching.forward
# ---------------------------------------------------------------------------
def keypoint_patches(img):
    # img: [H, W] single channel -> [N_kp, 9] 3x3 patches sampled ONLY at the
    # stride-KP_STRIDE keypoint grid (zero padded).  No full-res im2col blow-up.
    h, w = img.shape
    p = jnp.pad(img, 1)
    taps = [p[dy:dy + h:KP_STRIDE, dx:dx + w:KP_STRIDE]
            for dy in range(3) for dx in range(3)]
    kh, kw = h // KP_STRIDE, w // KP_STRIDE
    return jnp.stack(taps, axis=-1).reshape(kh * kw, 9)


def darkfeat_standin(image, w_mat, b_mat):
    # TODO(synk): DarkFeat backbone/detector is not provided in the source module;
    # using a deterministic single-conv + grid-keypoint stand-in with the same
    # output contract: {'keypoints', 'scores', 'descriptors'}.
    img = image[0, 0]                                   # [H, W]
    h, w = img.shape
    patches = keypoint_patches(img)                     # [N_kp, 9]
    desc, score_col = conv_descriptors(patches, w_mat, b_mat)   # Pallas (fused)

    ys = jnp.arange(0, h, KP_STRIDE)
    xs = jnp.arange(0, w, KP_STRIDE)
    gy, gx = jnp.meshgrid(ys, xs, indexing="ij")
    keypoints = jnp.stack([gx.reshape(-1), gy.reshape(-1)], axis=-1).astype(jnp.float32)

    return {"keypoints": keypoints, "scores": score_col[:, 0], "descriptors": desc}


def nnmatching_forward(data, params):
    """Mirrors NNMatching.forward: run the feature extractor on image0/image1 if
    keypoints are not given, stack the per-image lists (batch dim of 1), then run
    the NN matcher and merge its outputs into pred."""
    pred = {}
    if "keypoints0" not in data:
        pred0 = darkfeat_standin(data["image0"], params["w_conv"], params["b_conv"])
        pred = {**pred, **{k + "0": v[None] for k, v in pred0.items()}}  # stack([v])
    if "keypoints1" not in data:
        pred1 = darkfeat_standin(data["image1"], params["w_conv"], params["b_conv"])
        pred = {**pred, **{k + "1": v[None] for k, v in pred1.items()}}
    data = {**data, **pred}
    nn_out = nn_match(data["descriptors0"][0], data["descriptors1"][0])  # Pallas
    pred = {**pred, **nn_out}
    return pred


if __name__ == "__main__":
    key = jax.random.PRNGKey(0)
    k1, k2, k3, k4 = jax.random.split(key, 4)

    H = W = 16
    image0 = jax.random.uniform(k1, (1, 1, H, W), dtype=jnp.float32)  # NCHW
    image1 = jax.random.uniform(k2, (1, 1, H, W), dtype=jnp.float32)  # NCHW

    # Deterministic synthetic conv weights: PyTorch layout [D, Cin=1, 3, 3],
    # reshaped to the [9, D] matmul layout used by the Pallas feature kernel.
    w_conv_nchw = jax.random.normal(k3, (D_DESC, 1, 3, 3), dtype=jnp.float32) * 0.5
    b_conv = jax.random.normal(k4, (1, D_DESC), dtype=jnp.float32) * 0.1
    params = {
        "w_conv": w_conv_nchw.reshape(D_DESC, 9).T,   # [9, D]
        "b_conv": b_conv,                             # [1, D]
    }

    pred = nnmatching_forward({"image0": image0, "image1": image1}, params)
    jax.block_until_ready(pred)
    print("KERNEL_OK")
</pallas_src>

<mosaic_0001>
module attributes {stable_mosaic.version = 11 : i64} {
  func.func @_desc_kernel(%arg0: i32, %arg1: memref<32x9xf32, #tpu.memory_space<vmem>>, %arg2: memref<9x32xf32, #tpu.memory_space<vmem>>, %arg3: memref<1x32xf32, #tpu.memory_space<vmem>>, %arg4: memref<32x32xf32, #tpu.memory_space<vmem>>, %arg5: memref<32x1xf32, #tpu.memory_space<vmem>>) attributes {dimension_semantics = [#tpu.dimension_semantics<parallel>], iteration_bounds = array<i64: 2>, scalar_prefetch = 0 : i64, scratch_operands = 0 : i64, tpu.core_type = #tpu.core_type<tc>, window_params = [{transform_indices = @transform_0, window_bounds = array<i64: 32, 9>}, {pipeline_mode = #tpu.pipeline_mode<synchronous>, transform_indices = @transform_1, window_bounds = array<i64: 9, 32>}, {pipeline_mode = #tpu.pipeline_mode<synchronous>, transform_indices = @transform_2, window_bounds = array<i64: 1, 32>}, {transform_indices = @transform_3, window_bounds = array<i64: 32, 32>}, {transform_indices = @transform_4, window_bounds = array<i64: 32, 1>}]} {
    %c0 = arith.constant 0 : index
    %c0_0 = arith.constant 0 : index
    %0 = vector.load %arg1[%c0, %c0_0] : memref<32x9xf32, #tpu.memory_space<vmem>>, vector<32x9xf32>
    %c0_1 = arith.constant 0 : index
    %c0_2 = arith.constant 0 : index
    %1 = vector.load %arg2[%c0_1, %c0_2] : memref<9x32xf32, #tpu.memory_space<vmem>>, vector<9x32xf32>
    %cst = arith.constant dense<0.000000e+00> : vector<32x32xf32>
    %2 = tpu.matmul %0, %1, %cst {dimension_numbers = #tpu.dot_dimension_numbers<[1], [0], [0], [1], [0, 0, 1, 1], [], []>} : vector<32x9xf32>, vector<9x32xf32>, vector<32x32xf32> -> vector<32x32xf32>
    %c0_3 = arith.constant 0 : index
    %c0_4 = arith.constant 0 : index
    %3 = vector.load %arg3[%c0_3, %c0_4] : memref<1x32xf32, #tpu.memory_space<vmem>>, vector<1x32xf32>
    %4 = vector.broadcast %3 : vector<1x32xf32> to vector<32x32xf32>
    %5 = arith.addf %2, %4 : vector<32x32xf32>
    %cst_5 = arith.constant 0.000000e+00 : f32
    %6 = vector.broadcast %cst_5 : f32 to vector<32x32xf32>
    %7 = arith.maximumf %5, %6 : vector<32x32xf32>
    %8 = arith.mulf %7, %7 : vector<32x32xf32>
    %cst_6 = arith.constant dense<0.000000e+00> : vector<32xf32>
    %9 = vector.multi_reduction <add>, %8, %cst_6 [1] : vector<32x32xf32> to vector<32xf32>
    %10 = vector.shape_cast %9 : vector<32xf32> to vector<32x1xf32>
    %cst_7 = arith.constant 9.99999993E-9 : f32
    %11 = vector.broadcast %cst_7 : f32 to vector<32x1xf32>
    %12 = arith.addf %10, %11 : vector<32x1xf32>
    %13 = math.rsqrt %12 : vector<32x1xf32>
    %14 = vector.broadcast %13 : vector<32x1xf32> to vector<32x32xf32>
    %15 = arith.mulf %7, %14 : vector<32x32xf32>
    %c0_8 = arith.constant 0 : index
    %c0_9 = arith.constant 0 : index
    %16 = vector.load %arg4[%c0_8, %c0_9] : memref<32x32xf32, #tpu.memory_space<vmem>>, vector<32x32xf32>
    tpu.vector_store %arg4[%c0_8, %c0_9], %15 {strides = array<i32>} : memref<32x32xf32, #tpu.memory_space<vmem>>, vector<32x32xf32>,
    %17 = arith.mulf %12, %13 : vector<32x1xf32>
    %cst_10 = arith.constant 1.000000e+00 : f32
    %18 = vector.broadcast %cst_10 : f32 to vector<32x1xf32>
    %19 = arith.addf %18, %17 : vector<32x1xf32>
    %20 = arith.divf %17, %19 : vector<32x1xf32>
    %c0_11 = arith.constant 0 : index
    %c0_12 = arith.constant 0 : index
    %21 = vector.load %arg5[%c0_11, %c0_12] : memref<32x1xf32, #tpu.memory_space<vmem>>, vector<32x1xf32>
    tpu.vector_store %arg5[%c0_11, %c0_12], %20 {strides = array<i32>} : memref<32x1xf32, #tpu.memory_space<vmem>>, vector<32x1xf32>,
    return
  }
  func.func @transform_0(%arg0: i32) -> (i32, i32) {
    %c0_i32 = arith.constant 0 : i32
    %c0_i32_0 = arith.constant 0 : i32
    return %arg0, %c0_i32 : i32, i32
  }
  func.func @transform_1(%arg0: i32) -> (i32, i32) {
    %c0_i32 = arith.constant 0 : i32
    %c0_i32_0 = arith.constant 0 : i32
    %c0_i32_1 = arith.constant 0 : i32
    return %c0_i32, %c0_i32_0 : i32, i32
  }
  func.func @transform_2(%arg0: i32) -> (i32, i32) {
    %c0_i32 = arith.constant 0 : i32
    %c0_i32_0 = arith.constant 0 : i32
    %c0_i32_1 = arith.constant 0 : i32
    return %c0_i32, %c0_i32_0 : i32, i32
  }
  func.func @transform_3(%arg0: i32) -> (i32, i32) {
    %c0_i32 = arith.constant 0 : i32
    %c0_i32_0 = arith.constant 0 : i32
    return %arg0, %c0_i32 : i32, i32
  }
  func.func @transform_4(%arg0: i32) -> (i32, i32) {
    %c0_i32 = arith.constant 0 : i32
    %c0_i32_0 = arith.constant 0 : i32
    return %arg0, %c0_i32 : i32, i32
  }
}

</mosaic_0001>

<llo_original>
// kernel: tpu_custom_call.1
$region0: #{tpu_custom_call.1}
  #allocation0 [shape = 'u32[]', space=smem, size = 0x4, offset = 0x4, fixed_abs, tag = 'smem constant byte address 0x4 - core index']
  #allocation1 [shape = 'u32[144,128]{1,0:T(1,128)}', space=vmem, size = 0x12000, scoped, tag = 'internal scratch']
  %s0 = inlined_call_operand.vmem [shape: f32[64,9], index: 0, kind: input, shape index: {}]
  %s1 = inlined_call_operand.vmem [shape: f32[9,32], index: 1, kind: input, shape index: {}]
  %s2 = inlined_call_operand.vmem [shape: f32[1,32], index: 2, kind: input, shape index: {}]
  %s3 = inlined_call_operand.vmem [shape: f32[64,32], index: 3, kind: output, shape index: {0}]
  %s4 = inlined_call_operand.vmem [shape: f32[64,1], index: 4, kind: output, shape index: {1}]
  %5 = xla_tuple %s3, %s4
  %s6 = sld [smem:[#allocation0]]
  $region53: #{tpu_custom_call.1} parent=0
    _
  %s8 = ssub.s32 1, %s6
  %s9 = scalar_select 0, %s8, %s6
  loop: start=0, step=1, limit=4
  $region2: #{tpu_custom_call.1} parent=0 // loop_pre_header
    _
  $region3: #{tpu_custom_call.1} parent=0 // loop_header
    %s11 = sphi 0, %s15
    %p12 = scmp.ge.s32.totalorder %s11, 4
    %s21 = sphi 0, %s23
    %s24 = sphi 0, %s21
    %s25 = sphi 0, %s24
    %s41 = sphi 0, %s25
    %s45 = sphi 0, %s45
    %s47 = sphi 0, %s45
    %s48 = sphi 0, %s47
    %s62 = sphi 0, %s48
    %s66 = sphi 0, %s66
    %s68 = sphi 0, %s66
    %s69 = sphi 0, %s68
    %s83 = sphi 0, %s69
    %s89 = sphi 0, %s91
    %s92 = sphi 0, %s89
    %s93 = sphi 0, %s92
    %s109 = sphi 0, %s93
    %s115 = sphi 0, %s117
    %s118 = sphi 0, %s115
    %s119 = sphi 0, %s118
    %s135 = sphi 0, %s119
  $region4: #{tpu_custom_call.1} parent=0 // loop_header_branch
    %14 = sbr.rel (%p12) target = $region8
  $region5: #{tpu_custom_call.1} parent=0 // loop_body
    %s16 = ssub.s32 %s11, 1
    %s17 = ssub.s32 %s11, 2
    %s18 = sadd.s32 %s11, 1
    %s19 = ssub.s32 %s11, %s18
    %p20 = scmp.eq.s32.totalorder %s19, 0
    %s22 = sadd.s32 %s21, 1
    %s23 = scalar_select %p20, %s21, %s22
    %p26 = pneg %p20
    %p27 = scmp.eq.s32.totalorder %s11, 1
    %p28 = por %p26, %p27
    %p29 = scmp.ne.s32.totalorder %s21, %s24
    %p30 = scmp.eq.s32.totalorder %s11, 0
    %p31 = por %p29, %p30
    %p32 = scmp.ne.s32.totalorder %s21, %s24
    %p33 = scmp.eq.s32.totalorder %s16, 1
    %p34 = por %p32, %p33
    %p35 = scmp.ne.s32.totalorder %s24, %s25
    %p36 = scmp.eq.s32.totalorder %s16, 0
    %p37 = por %p35, %p36
    %p38 = scmp.ne.s32.totalorder %s24, %s25
    %p39 = scmp.eq.s32.totalorder %s17, 1
    %p40 = por %p38, %p39
    %p42 = scmp.ne.s32.totalorder %s25, %s41
    %p43 = scmp.eq.s32.totalorder %s17, 0
    %p44 = por %p42, %p43
    %s46 = sadd.s32 %s45, 1
    %p49 = scmp.eq.s32.totalorder %s11, 1
    %p50 = scmp.ne.s32.totalorder %s45, %s47
    %p51 = scmp.eq.s32.totalorder %s11, 0
    %p52 = por %p50, %p51
    %p53 = scmp.ne.s32.totalorder %s45, %s47
    %p54 = scmp.eq.s32.totalorder %s16, 1
    %p55 = por %p53, %p54
    %p56 = scmp.ne.s32.totalorder %s47, %s48
    %p57 = scmp.eq.s32.totalorder %s16, 0
    %p58 = por %p56, %p57
    %p59 = scmp.ne.s32.totalorder %s47, %s48
    %p60 = scmp.eq.s32.totalorder %s17, 1
    %p61 = por %p59, %p60
    %p63 = scmp.ne.s32.totalorder %s48, %s62
    %p64 = scmp.eq.s32.totalorder %s17, 0
    %p65 = por %p63, %p64
    %s67 = sadd.s32 %s66, 1
    %p70 = scmp.eq.s32.totalorder %s11, 1
    %p71 = scmp.ne.s32.totalorder %s66, %s68
    %p72 = scmp.eq.s32.totalorder %s11, 0
    %p73 = por %p71, %p72
    %p74 = scmp.ne.s32.totalorder %s66, %s68
    %p75 = scmp.eq.s32.totalorder %s16, 1
    %p76 = por %p74, %p75
    %p77 = scmp.ne.s32.totalorder %s68, %s69
    %p78 = scmp.eq.s32.totalorder %s16, 0
    %p79 = por %p77, %p78
    %p80 = scmp.ne.s32.totalorder %s68, %s69
    %p81 = scmp.eq.s32.totalorder %s17, 1
    %p82 = por %p80, %p81
    %p84 = scmp.ne.s32.totalorder %s69, %s83
    %p85 = scmp.eq.s32.totalorder %s17, 0
    %p86 = por %p84, %p85
    %s87 = ssub.s32 %s11, %s18
    %p88 = scmp.eq.s32.totalorder %s87, 0
    %s90 = sadd.s32 %s89, 1
    %s91 = scalar_select %p88, %s89, %s90
    %p94 = pneg %p88
    %p95 = scmp.eq.s32.totalorder %s11, 1
    %p96 = por %p94, %p95
    %p97 = scmp.ne.s32.totalorder %s89, %s92
    %p98 = scmp.eq.s32.totalorder %s11, 0
    %p99 = por %p97, %p98
    %p100 = scmp.ne.s32.totalorder %s89, %s92
    %p101 = scmp.eq.s32.totalorder %s16, 1
    %p102 = por %p100, %p101
    %p103 = scmp.ne.s32.totalorder %s92, %s93
    %p104 = scmp.eq.s32.totalorder %s16, 0
    %p105 = por %p103, %p104
    %p106 = scmp.ne.s32.totalorder %s92, %s93
    %p107 = scmp.eq.s32.totalorder %s17, 1
    %p108 = por %p106, %p107
    %p110 = scmp.ne.s32.totalorder %s93, %s109
    %p111 = scmp.eq.s32.totalorder %s17, 0
    %p112 = por %p110, %p111
    %s113 = ssub.s32 %s11, %s18
    %p114 = scmp.eq.s32.totalorder %s113, 0
    %s116 = sadd.s32 %s115, 1
    %s117 = scalar_select %p114, %s115, %s116
    %p120 = pneg %p114
    %p121 = scmp.eq.s32.totalorder %s11, 1
    %p122 = por %p120, %p121
    %p123 = scmp.ne.s32.totalorder %s115, %s118
    %p124 = scmp.eq.s32.totalorder %s11, 0
    %p125 = por %p123, %p124
    %p126 = scmp.ne.s32.totalorder %s115, %s118
    %p127 = scmp.eq.s32.totalorder %s16, 1
    %p128 = por %p126, %p127
    %p129 = scmp.ne.s32.totalorder %s118, %s119
    %p130 = scmp.eq.s32.totalorder %s16, 0
    %p131 = por %p129, %p130
    %p132 = scmp.ne.s32.totalorder %s118, %s119
    %p133 = scmp.eq.s32.totalorder %s17, 1
    %p134 = por %p132, %p133
    %p136 = scmp.ne.s32.totalorder %s119, %s135
    %p137 = scmp.eq.s32.totalorder %s17, 0
    %p138 = por %p136, %p137
    %p139 = scmp.le.s32.totalorder 1, %s11
    %p140 = scmp.lt.s32.totalorder %s11, 3
    %p141 = pnand %p139, %p140
    %p142 = pneg %p141
    // Predicated region
    $region9: #{tpu_custom_call.1} parent=5 // pred_check
      _
    $region10: #{tpu_custom_call.1} parent=5 // pred_check_branch
      %144 = sbr.rel (%p141) target = $region12
    $region11: #{tpu_custom_call.1} parent=5 // pred_region
      %s145 = ssub.s32 %s11, 1
      // Predicated region
      $region13: #{tpu_custom_call.1} parent=11 // pred_check
        %p146 = pneg %p58
      $region14: #{tpu_custom_call.1} parent=11 // pred_check_branch
        %148 = sbr.rel (%p146) target = $region16
      $region15: #{tpu_custom_call.1} parent=11 // pred_region
        _
      $region16: #{tpu_custom_call.1} parent=11 // pred_fallthru
        _
      // Predicated region
      $region17: #{tpu_custom_call.1} parent=11 // pred_check
        %p149 = pneg %p79
      $region18: #{tpu_custom_call.1} parent=11 // pred_check_branch
        %151 = sbr.rel (%p149) target = $region20
      $region19: #{tpu_custom_call.1} parent=11 // pred_region
        _
      $region20: #{tpu_custom_call.1} parent=11 // pred_fallthru
        _
    $region12: #{tpu_custom_call.1} parent=5 // pred_fallthru
      _
    %p152 = scmp.lt.s32.totalorder %s11, 2
    // Predicated region
    $region21: #{tpu_custom_call.1} parent=5 // pred_check
      %p153 = pneg %p152
    $region22: #{tpu_custom_call.1} parent=5 // pred_check_branch
      %155 = sbr.rel (%p153) target = $region24
    $region23: #{tpu_custom_call.1} parent=5 // pred_region
      // Predicated region
      $region25: #{tpu_custom_call.1} parent=23 // pred_check
        %p156 = pneg %p31
      $region26: #{tpu_custom_call.1} parent=23 // pred_check_branch
        %158 = sbr.rel (%p156) target = $region28
      $region27: #{tpu_custom_call.1} parent=23 // pred_region
        %s159 = smul.u32 4, %s11
        %p160 = scmp.lt.s32.totalorder %s159, 7
        %s161 = scalar_select %p160, %s159, 7
        %s162 = smul.addr %s161, 8
        %s163 = scalar_lea.vmem %s0, %s162
        %s164 = smul.u32 4, %s11
      $region28: #{tpu_custom_call.1} parent=23 // pred_fallthru
        _
    $region24: #{tpu_custom_call.1} parent=5 // pred_fallthru
      _
    %p165 = scmp.le.s32.totalorder 1, %s11
    %p166 = scmp.lt.s32.totalorder %s11, 3
    %p167 = pnand %p165, %p166
    %p168 = pneg %p167
    // Predicated region
    $region29: #{tpu_custom_call.1} parent=5 // pred_check
      _
    $region30: #{tpu_custom_call.1} parent=5 // pred_check_branch
      %170 = sbr.rel (%p167) target = $region32
    $region31: #{tpu_custom_call.1} parent=5 // pred_region
      %s171 = ssub.s32 %s11, 1
      %s172 = smul.u32 4, %s16
      %p173 = scmp.lt.s32.totalorder %s172, 7
      %s174 = scalar_select %p173, %s172, 7
      %s175 = smul.addr %s174, 8
      %s176 = scalar_lea.vmem %s0, %s175
      %p177 = pneg %p37
      %p178 = pneg %p34
      %p179 = pneg %p58
      %p180 = pneg %p55
      %p181 = pneg %p79
      %p182 = pneg %p76
      %p183 = pneg %p105
      %p184 = pneg %p102
      %s185 = smul.u32 4, %s16
      %p186 = scmp.lt.s32.totalorder %s185, 7
      %s187 = scalar_select %p186, %s185, 7
      %s188 = smul.addr %s187, 8
      %s189 = scalar_lea.vmem %s3, %s188
      %p190 = pneg %p131
      %p191 = pneg %p128
      %s192 = smul.u32 4, %s16
      %p193 = scmp.lt.s32.totalorder %s192, 7
      %s194 = scalar_select %p193, %s192, 7
      %s195 = smul.addr %s194, 8
      %s196 = scalar_lea.vmem %s4, %s195
      %s197 = smul.u32 4, %s16
      %p198 = scmp.lt.s32.totalorder %s197, 7
      %s199 = scalar_select %p198, %s197, 7
      %s200 = smul.addr %s199, 8
      %s201 = scalar_lea.vmem %s0, %s200
      %s202 = smul.u32 4, %s16
      %s203 = smul.u32 4, %s16
      %p204 = scmp.lt.s32.totalorder %s203, 7
      %s205 = scalar_select %p204, %s203, 7
      %s206 = smul.addr %s205, 8
      %s207 = scalar_lea.vmem %s3, %s206
      %s208 = smul.u32 4, %s16
      %s209 = smul.u32 4, %s16
      %p210 = scmp.lt.s32.totalorder %s209, 7
      %s211 = scalar_select %p210, %s209, 7
      %s212 = smul.addr %s211, 8
      %s213 = scalar_lea.vmem %s4, %s212
      %s214 = smul.u32 4, %s16
      %v215 = vld [vmem:[%s201] sm:$0xff]
      %v216 = vld [vmem:[%s201 + $0x8] sm:$0xff]
      %v217 = vld [vmem:[%s201 + $0x10] sm:$0xff]
      %v218 = vld [vmem:[%s201 + $0x18] sm:$0xff]
      %v219 = vld [vmem:[%s1] sm:$0xff]
      %v220 = vld [vmem:[%s1 + $0x8] sm:$0x1]
      %v221 = vld [vmem:[%s2] sm:$0x1]
      %v223 = vlaneseq
      %v224 = vshrl.u32 %v223, 7
      %v225 = vsub.s32 0, %v224
      %v226 = vrot.slane %v221, %v225
      %vm228 = vcmask 72704
      %v230 = vsel %vm228, %v215, 0
      %v233 = vsel %vm228, %v216, 0
      %v236 = vsel %vm228, %v217, 0
      %v239 = vsel %vm228, %v218, 0
      %vm241 = vcmask 1040384
      %v243 = vsel %vm241, %v220, 0
      %245 = vmatprep.subr.mxu0 0.0
      %246 = vmatpush1.msra.mxu0 0.0
      %247 = vmatprep.subr.mxu0 0.0
      %248 = vmatpush1.msra.mxu0 0.0
      %249 = vmatprep.subr.mxu0 0.0
      %250 = vmatpush1.msra.mxu0 0.0
      %251 = vmatprep.subr.mxu0 0.0
      %252 = vmatpush1.msra.mxu0 0.0
      %253 = vmatprep.subr.mxu0 0.0
      %254 = vmatpush1.msra.mxu0 0.0
      %255 = vmatprep.subr.mxu0 0.0
      %256 = vmatpush1.msra.mxu0 0.0
      %257 = vmatprep.subr.mxu0 0.0
      %258 = vmatpush1.msra.mxu0 0.0
      %259 = vmatprep.subr.mxu0 0.0
      %260 = vmatpush1.msra.mxu0 0.0
      %261 = vmatprep.subr.mxu0 0.0
      %262 = vmatpush1.msra.mxu0 0.0
      %263 = vmatprep.subr.mxu0 0.0
      %264 = vmatpush1.msra.mxu0 0.0
      %265 = vmatprep.subr.mxu0 0.0
      %266 = vmatpush1.msra.mxu0 0.0
      %267 = vmatprep.subr.mxu0 0.0
      %268 = vmatpush1.msra.mxu0 0.0
      %269 = vmatprep.subr.mxu0 0.0
      %270 = vmatpush1.msra.mxu0 0.0
      %271 = vmatprep.subr.mxu0 0.0
      %272 = vmatpush1.msra.mxu0 0.0
      %273 = vmatprep.subr.mxu0 0.0
      %274 = vmatpush1.msra.mxu0 %v243
      %275 = vmatprep.subr.mxu0 0.0
      %276 = vmatpush1.msra.mxu0 %v219
      %277 = vmatprep.subr.mxu0 0.0
      %278 = vmatpush2.msra.mxu0 0.0
      %279 = vmatprep.subr.mxu0 0.0
      %280 = vmatpush2.msra.mxu0 0.0
      %281 = vmatprep.subr.mxu0 0.0
      %282 = vmatpush2.msra.mxu0 0.0
      %283 = vmatprep.subr.mxu0 0.0
      %284 = vmatpush2.msra.mxu0 0.0
      %285 = vmatprep.subr.mxu0 0.0
      %286 = vmatpush2.msra.mxu0 0.0
      %287 = vmatprep.subr.mxu0 0.0
      %288 = vmatpush2.msra.mxu0 0.0
      %289 = vmatprep.subr.mxu0 0.0
      %290 = vmatpush2.msra.mxu0 0.0
      %291 = vmatprep.subr.mxu0 0.0
      %292 = vmatpush2.msra.mxu0 0.0
      %293 = vmatprep.subr.mxu0 0.0
      %294 = vmatpush2.msra.mxu0 0.0
      %295 = vmatprep.subr.mxu0 0.0
      %296 = vmatpush2.msra.mxu0 0.0
      %297 = vmatprep.subr.mxu0 0.0
      %298 = vmatpush2.msra.mxu0 0.0
      %299 = vmatprep.subr.mxu0 0.0
      %300 = vmatpush2.msra.mxu0 0.0
      %301 = vmatprep.subr.mxu0 0.0
      %302 = vmatpush2.msra.mxu0 0.0
      %303 = vmatprep.subr.mxu0 0.0
      %304 = vmatpush2.msra.mxu0 0.0
      %305 = vmatprep.subr.mxu0 0.0
      %306 = vmatpush2.msra.mxu0 0.0
      %307 = vmatprep.subr.mxu0 0.0
      %308 = vmatpush2.msra.mxu0 0.0
      %309 = vmatprep.mubr.f32.mxu0 0.0
      %310 = vmatmul.mubr.f32.gmra.mxu0 %v230
      %v311 = vpop.f32.mrf.mxu0
      %v312 = vadd.f32 %v226, %v311
      %v313 = vpop.f32.mrf.mxu0
      %314 = vmatprep.mubr.f32.mxu0 0.0
      %315 = vmatmul.mubr.f32.gmra.mxu0 %v233
      %v316 = vpop.f32.mrf.mxu0
      %v317 = vadd.f32 %v226, %v316
      %v318 = vpop.f32.mrf.mxu0
      %319 = vmatprep.mubr.f32.mxu0 0.0
      %320 = vmatmul.mubr.f32.gmra.mxu0 %v236
      %v321 = vpop.f32.mrf.mxu0
      %v322 = vadd.f32 %v226, %v321
      %v323 = vpop.f32.mrf.mxu0
      %324 = vmatprep.mubr.f32.mxu0 0.0
      %325 = vmatmul.mubr.f32.gmra.mxu0 %v239
      %v326 = vpop.f32.mrf.mxu0
      %v327 = vadd.f32 %v226, %v326
      %v328 = vpop.f32.mrf.mxu0
      %329 = vdwg.mxu0
      %v330 = vmax.f32 %v312, 0.0
      %v331 = vmax.f32 %v317, 0.0
      %v332 = vmax.f32 %v322, 0.0
      %v333 = vmax.f32 %v327, 0.0
      %v334 = vmul.f32 %v330, %v330
      %v335 = vmul.f32 %v331, %v331
      %v336 = vmul.f32 %v332, %v332
      %v337 = vmul.f32 %v333, %v333
      %vm338 = vcmask 261120
      %v339 = vsel %vm338, %v334, 0.0
      %340 = vadd.xlane.f32.xlu0 %v339
      %v341 = vpop.xlane.xlu0 %340
      %v342 = vsel %vm338, %v335, 0.0
      %343 = vadd.xlane.f32.xlu0 %v342
      %v344 = vpop.xlane.xlu0 %343
      %v345 = vsel %vm338, %v336, 0.0
      %346 = vadd.xlane.f32.xlu0 %v345
      %v347 = vpop.xlane.xlu0 %346
      %v348 = vsel %vm338, %v337, 0.0
      %349 = vadd.xlane.f32.xlu0 %v348
      %v350 = vpop.xlane.xlu0 %349
      %v351 = vadd.f32 %v341, 1e-08
      %v352 = vadd.f32 %v344, 1e-08
      %v353 = vadd.f32 %v347, 1e-08
      %v354 = vadd.f32 %v350, 1e-08
      %v355 = vrsqrt.pop %v351
      %v356 = vrsqrt.pop %v352
      %v357 = vrsqrt.pop %v353
      %v358 = vrsqrt.pop %v354
      %v359 = vmul.f32 %v330, %v355
      %v360 = vmul.f32 %v331, %v356
      %v361 = vmul.f32 %v332, %v357
      %v362 = vmul.f32 %v333, %v358
      %363 = vst.msk [vmem:[%s207] sm:$0xff] %vm338, %v359
      %364 = vst.msk [vmem:[%s207 + $0x8] sm:$0xff] %vm338, %v360
      %365 = vst.msk [vmem:[%s207 + $0x10] sm:$0xff] %vm338, %v361
      %366 = vst.msk [vmem:[%s207 + $0x18] sm:$0xff] %vm338, %v362
      %v367 = vmul.f32 %v351, %v355
      %v368 = vmul.f32 %v352, %v356
      %v369 = vmul.f32 %v353, %v357
      %v370 = vmul.f32 %v354, %v358
      %v371 = vadd.f32 %v367, 1.0
      %v372 = vadd.f32 %v368, 1.0
      %v373 = vadd.f32 %v369, 1.0
      %v374 = vadd.f32 %v370, 1.0
      %v375 = vrcp.pop %v371
      %v376 = vmul.f32 %v367, %v375
      %v377 = vrcp.pop %v372
      %v378 = vmul.f32 %v368, %v377
      %v379 = vrcp.pop %v373
      %v380 = vmul.f32 %v369, %v379
      %v381 = vrcp.pop %v374
      %v382 = vmul.f32 %v370, %v381
      %vm383 = vcmask 7168
      %384 = vst.msk [vmem:[%s213] sm:$0xff] %vm383, %v376
      %385 = vst.msk [vmem:[%s213 + $0x8] sm:$0xff] %vm383, %v378
      %386 = vst.msk [vmem:[%s213 + $0x10] sm:$0xff] %vm383, %v380
      %387 = vst.msk [vmem:[%s213 + $0x18] sm:$0xff] %vm383, %v382
      %s388 = smul.u32 4, %s16
      %p389 = scmp.lt.s32.totalorder %s388, 7
      %s390 = scalar_select %p389, %s388, 7
      %s391 = smul.addr %s390, 8
      %s392 = scalar_lea.vmem %s3, %s391
      %s393 = smul.u32 4, %s16
      %p394 = scmp.lt.s32.totalorder %s393, 7
      %s395 = scalar_select %p394, %s393, 7
      %s396 = smul.addr %s395, 8
      %s397 = scalar_lea.vmem %s4, %s396
      // Predicated region
      $region33: #{tpu_custom_call.1} parent=31 // pred_check
        %p398 = pneg %p102
      $region34: #{tpu_custom_call.1} parent=31 // pred_check_branch
        %400 = sbr.rel (%p398) target = $region36
      $region35: #{tpu_custom_call.1} parent=31 // pred_region
        %s401 = smul.u32 4, %s16
      $region36: #{tpu_custom_call.1} parent=31 // pred_fallthru
        _
      // Predicated region
      $region37: #{tpu_custom_call.1} parent=31 // pred_check
        %p402 = pneg %p128
      $region38: #{tpu_custom_call.1} parent=31 // pred_check_branch
        %404 = sbr.rel (%p402) target = $region40
      $region39: #{tpu_custom_call.1} parent=31 // pred_region
        %s405 = smul.u32 4, %s16
      $region40: #{tpu_custom_call.1} parent=31 // pred_fallthru
        _
    $region32: #{tpu_custom_call.1} parent=5 // pred_fallthru
      _
    %p406 = scmp.le.s32.totalorder 2, %s11
    // Predicated region
    $region41: #{tpu_custom_call.1} parent=5 // pred_check
      %p407 = pneg %p406
    $region42: #{tpu_custom_call.1} parent=5 // pred_check_branch
      %409 = sbr.rel (%p407) target = $region44
    $region43: #{tpu_custom_call.1} parent=5 // pred_region
      %s410 = ssub.s32 %s11, 2
      // Predicated region
      $region45: #{tpu_custom_call.1} parent=43 // pred_check
        %p411 = pneg %p108
      $region46: #{tpu_custom_call.1} parent=43 // pred_check_branch
        %413 = sbr.rel (%p411) target = $region48
      $region47: #{tpu_custom_call.1} parent=43 // pred_region
        %s414 = smul.u32 4, %s17
        %p415 = scmp.lt.s32.totalorder %s414, 7
        %s416 = scalar_select %p415, %s414, 7
        %s417 = smul.addr %s416, 8
        %s418 = scalar_lea.vmem %s3, %s417
      $region48: #{tpu_custom_call.1} parent=43 // pred_fallthru
        _
      // Predicated region
      $region49: #{tpu_custom_call.1} parent=43 // pred_check
        %p419 = pneg %p134
      $region50: #{tpu_custom_call.1} parent=43 // pred_check_branch
        %421 = sbr.rel (%p419) target = $region52
      $region51: #{tpu_custom_call.1} parent=43 // pred_region
        %s422 = smul.u32 4, %s17
        %p423 = scmp.lt.s32.totalorder %s422, 7
        %s424 = scalar_select %p423, %s422, 7
        %s425 = smul.addr %s424, 8
        %s426 = scalar_lea.vmem %s4, %s425
      $region52: #{tpu_custom_call.1} parent=43 // pred_fallthru
        _
    $region44: #{tpu_custom_call.1} parent=5 // pred_fallthru
      _
  $region6: #{tpu_custom_call.1} parent=0 // loop_footer
    %s15 = sadd.s32 1, %s11
  $region7: #{tpu_custom_call.1} parent=0 // loop_footer_branch
    %10 = sbr.rel target = $region3
  $region8: #{tpu_custom_call.1} parent=0 // loop_exit
    _

</llo_original>
